<compile_context>
chip_gen: v5e
topology: v5e:2x2
jax: 0.10.0
libtpu: 0.0.40
codegen_flags: <defaults>
</compile_context>

<pallas_src>
import math

import jax
import jax.numpy as jnp
from jax.experimental import pallas as pl
from jax.experimental.pallas import tpu as pltpu


# Total pipelined VMEM target (both double-buffered in+out tiles together).
# Fits v7x (64 MiB physical / 32 MiB scoped), v6e/v5e (128 MiB physical).
_VMEM_BUDGET_BYTES = 20 * 1024 * 1024
_VMEM_LIMIT_BYTES = 32 * 1024 * 1024


def _round_up(x: int, m: int) -> int:
    return ((x + m - 1) // m) * m


def _budget_rows(dp: int, itemsize: int, extra_bytes_per_row: int) -> int:
    """Rows per tile so that 2 (double-buffer) * (in + out + extras) stays
    within the pipelined-VMEM budget.  Row count aligned for sublane packing
    (8 rows for 32-bit dtypes, 16 for bf16, 32 for int8/fp8)."""
    per_row = 2 * dp * itemsize + extra_bytes_per_row
    rows = _VMEM_BUDGET_BYTES // (2 * per_row)
    align = max(8, 32 // itemsize)
    rows = max(align, (rows // align) * align)
    return rows


def _pe_arange_kernel(x_ref, c_ref, o_ref):
    # x_ref: (BB, TS, Dp) input tile; c_ref: (1, 2, Dp) [div_term; phase].
    bb, ts, dp = x_ref.shape
    s0 = pl.program_id(1) * ts
    # Positions past the true sequence length in a partial tile are garbage,
    # but those rows are discarded by the masked writeback -- benign.
    pos = (s0 + jax.lax.broadcasted_iota(jnp.int32, (bb, ts, dp), 1)
           ).astype(jnp.float32)
    div = c_ref[:, 0:1, :]                                  # (1, 1, Dp)
    phase = c_ref[:, 1:2, :]                                # (1, 1, Dp)
    pe = jnp.sin(pos * div + phase)                         # one EUP op / elem
    o_ref[...] = (x_ref[...].astype(jnp.float32) + pe).astype(o_ref.dtype)


def _pe_gather_kernel(x_ref, pos_ref, c_ref, o_ref):
    # x_ref: (TR, Dp); pos_ref: (TR, 1) int32; c_ref: (2, Dp) [div; phase].
    pos = pos_ref[...].astype(jnp.float32)                  # (TR, 1)
    div = c_ref[0:1, :]                                     # (1, Dp)
    phase = c_ref[1:2, :]                                   # (1, Dp)
    pe = jnp.sin(pos * div + phase)                         # (TR, Dp)
    o_ref[...] = (x_ref[...].astype(jnp.float32) + pe).astype(o_ref.dtype)


def positional_encoding(x: jax.Array,
                        position_ids: jax.Array | None = None,
                        *,
                        max_len: int = 5000) -> jax.Array:
    """Pallas equivalent of PositionalEncoding(d_model).forward(x, position_ids)."""
    B, S, D = x.shape
    assert S <= max_len
    dtype = x.dtype
    itemsize = jnp.dtype(dtype).itemsize
    Dp = _round_up(D, 128)                     # lane-dense output (no vst.msk)

    # Per-lane constants: frequency and the (d%2)*pi/2 phase that folds cos
    # into sin.  Padded lanes get 0 (their output is sliced away anyway).
    d = jnp.arange(Dp, dtype=jnp.int32)
    valid = d < D
    div_term = jnp.where(
        valid,
        jnp.exp((2 * (d // 2)).astype(jnp.float32) * (-math.log(10000.0) / D)),
        0.0)
    phase = jnp.where(valid, (d % 2).astype(jnp.float32) * (math.pi / 2), 0.0)

    xp = x if Dp == D else jnp.pad(x, ((0, 0), (0, 0), (0, Dp - D)))

    if position_ids is None:
        # ---- default path: positions generated in-kernel, no pos input ----
        consts = jnp.stack([div_term, phase])[None]          # (1, 2, Dp)
        rows = _budget_rows(Dp, itemsize, extra_bytes_per_row=0)
        if rows >= S:
            ts = S                                  # full-extent seq block
            bb = min(B, max(1, rows // S))          # pack batches into a tile
        else:
            ts = rows                               # aligned multiple of 8/16/32
            bb = 1
        grid = (pl.cdiv(B, bb), pl.cdiv(S, ts))
        out = pl.pallas_call(
            _pe_arange_kernel,
            out_shape=jax.ShapeDtypeStruct((B, S, Dp), dtype),
            grid=grid,
            in_specs=[
                pl.BlockSpec((bb, ts, Dp), lambda i, j: (i, j, 0)),
                pl.BlockSpec((1, 2, Dp), lambda i, j: (0, 0, 0)),
            ],
            out_specs=pl.BlockSpec((bb, ts, Dp), lambda i, j: (i, j, 0)),
            compiler_params=pltpu.CompilerParams(
                dimension_semantics=("parallel", "parallel"),
                vmem_limit_bytes=_VMEM_LIMIT_BYTES),
            cost_estimate=pl.CostEstimate(
                flops=3 * B * S * D,
                transcendentals=B * S * D,
                bytes_accessed=2 * B * S * D * itemsize),
        )(xp, consts)
    else:
        # ---- explicit position_ids path: flatten rows, 1-D grid ----
        assert position_ids.shape == (B, S)
        consts = jnp.stack([div_term, phase])                # (2, Dp)
        N = B * S
        x2 = xp.reshape(N, Dp)
        pos2 = position_ids.astype(jnp.int32).reshape(N, 1)
        # (TR, 1) pos block pads to 128 lanes in VMEM -> 512 B/row, accounted.
        rows = _budget_rows(Dp, itemsize, extra_bytes_per_row=512)
        tr = min(N, rows)
        grid = (pl.cdiv(N, tr),)
        out2 = pl.pallas_call(
            _pe_gather_kernel,
            out_shape=jax.ShapeDtypeStruct((N, Dp), dtype),
            grid=grid,
            in_specs=[
                pl.BlockSpec((tr, Dp), lambda r: (r, 0)),
                pl.BlockSpec((tr, 1), lambda r: (r, 0)),
                pl.BlockSpec((2, Dp), lambda r: (0, 0)),
            ],
            out_specs=pl.BlockSpec((tr, Dp), lambda r: (r, 0)),
            compiler_params=pltpu.CompilerParams(
                dimension_semantics=("parallel",),
                vmem_limit_bytes=_VMEM_LIMIT_BYTES),
            cost_estimate=pl.CostEstimate(
                flops=3 * N * D,
                transcendentals=N * D,
                bytes_accessed=2 * N * D * itemsize + N * 4),
        )(x2, pos2, consts)
        out = out2.reshape(B, S, Dp)

    if Dp != D:
        out = out[..., :D]
    return out


def _reference(x, position_ids, max_len=5000):
    """Pure-JAX replica of the PyTorch forward (eval mode) for verification."""
    B, S, D = x.shape
    pos_table = jnp.arange(max_len, dtype=jnp.float32)[:, None]          # (L, 1)
    div_term = jnp.exp(jnp.arange(0, D, 2, dtype=jnp.float32)
                       * (-math.log(10000.0) / D))
    pe = jnp.zeros((max_len, D), jnp.float32)
    pe = pe.at[:, 0::2].set(jnp.sin(pos_table * div_term))
    pe = pe.at[:, 1::2].set(jnp.cos(pos_table * div_term))
    if position_ids is None:
        return x + pe[None, :S, :]
    return x + jnp.take(pe, position_ids, axis=0)


if __name__ == "__main__":
    B, S, D = 2, 8, 32
    key = jax.random.PRNGKey(0)
    kx, kp = jax.random.split(key)
    x = jax.random.normal(kx, (B, S, D), dtype=jnp.float32)
    position_ids = jax.random.randint(kp, (B, S), 0, 5000, dtype=jnp.int32)

    # default path (positions = arange(seq_len)): small angles -> tight match
    out_default = jax.block_until_ready(positional_encoding(x))
    ref_default = _reference(x, None)
    assert out_default.shape == (B, S, D)
    assert jnp.allclose(out_default, ref_default, atol=1e-5, rtol=1e-5)

    # explicit position_ids path (gather semantics). Positions go up to 5000,
    # so f32 range reduction in sin/cos (cos(x)=sin(x+pi/2) evaluated in f32)
    # limits absolute agreement with the table-based reference to ~1e-3.
    out_gather = jax.block_until_ready(positional_encoding(x, position_ids))
    ref_gather = _reference(x, position_ids)
    assert out_gather.shape == (B, S, D)
    assert jnp.allclose(out_gather, ref_gather, atol=5e-3, rtol=1e-3)

    print("KERNEL_OK")
</pallas_src>

<mosaic_0001>
module attributes {stable_mosaic.version = 11 : i64} {
  func.func @_pe_arange_kernel(%arg0: i32, %arg1: i32, %arg2: memref<2x8x128xf32, #tpu.memory_space<vmem>>, %arg3: memref<1x2x128xf32, #tpu.memory_space<vmem>>, %arg4: memref<2x8x128xf32, #tpu.memory_space<vmem>>) attributes {dimension_semantics = [#tpu.dimension_semantics<parallel>, #tpu.dimension_semantics<parallel>], iteration_bounds = array<i64: 1, 1>, scalar_prefetch = 0 : i64, scratch_operands = 0 : i64, tpu.core_type = #tpu.core_type<tc>, window_params = [{transform_indices = @transform_0, window_bounds = array<i64: 2, 8, 128>}, {pipeline_mode = #tpu.pipeline_mode<synchronous>, transform_indices = @transform_1, window_bounds = array<i64: 1, 2, 128>}, {transform_indices = @transform_2, window_bounds = array<i64: 2, 8, 128>}]} {
    %c8_i32 = arith.constant 8 : i32
    %0 = arith.muli %arg1, %c8_i32 : i32
    %1 = tpu.iota {dimensions = array<i32: 1>} : vector<2x8x128xi32>
    %2 = vector.broadcast %0 : i32 to vector<2x8x128xi32>
    %3 = arith.addi %2, %1 : vector<2x8x128xi32>
    %4 = arith.sitofp %3 : vector<2x8x128xi32> to vector<2x8x128xf32>
    %c0 = arith.constant 0 : index
    %c0_0 = arith.constant 0 : index
    %c0_1 = arith.constant 0 : index
    %5 = vector.load %arg3[%c0, %c0_0, %c0_1] : memref<1x2x128xf32, #tpu.memory_space<vmem>>, vector<1x1x128xf32>
    %c0_2 = arith.constant 0 : index
    %c1 = arith.constant 1 : index
    %c0_3 = arith.constant 0 : index
    %6 = vector.load %arg3[%c0_2, %c1, %c0_3] : memref<1x2x128xf32, #tpu.memory_space<vmem>>, vector<1x1x128xf32>
    %7 = vector.broadcast %5 : vector<1x1x128xf32> to vector<2x8x128xf32>
    %8 = arith.mulf %4, %7 : vector<2x8x128xf32>
    %9 = vector.broadcast %6 : vector<1x1x128xf32> to vector<2x8x128xf32>
    %10 = arith.addf %8, %9 : vector<2x8x128xf32>
    %11 = math.sin %10 : vector<2x8x128xf32>
    %c0_4 = arith.constant 0 : index
    %c0_5 = arith.constant 0 : index
    %c0_6 = arith.constant 0 : index
    %12 = vector.load %arg2[%c0_4, %c0_5, %c0_6] : memref<2x8x128xf32, #tpu.memory_space<vmem>>, vector<2x8x128xf32>
    %13 = arith.addf %12, %11 : vector<2x8x128xf32>
    %c0_7 = arith.constant 0 : index
    %c0_8 = arith.constant 0 : index
    %c0_9 = arith.constant 0 : index
    %14 = vector.load %arg4[%c0_7, %c0_8, %c0_9] : memref<2x8x128xf32, #tpu.memory_space<vmem>>, vector<2x8x128xf32>
    tpu.vector_store %arg4[%c0_7, %c0_8, %c0_9], %13 {strides = array<i32>} : memref<2x8x128xf32, #tpu.memory_space<vmem>>, vector<2x8x128xf32>,
    return
  }
  func.func @transform_0(%arg0: i32, %arg1: i32) -> (i32, i32, i32) {
    %c0_i32 = arith.constant 0 : i32
    %c0_i32_0 = arith.constant 0 : i32
    return %arg0, %arg1, %c0_i32 : i32, i32, i32
  }
  func.func @transform_1(%arg0: i32, %arg1: i32) -> (i32, i32, i32) {
    %c0_i32 = arith.constant 0 : i32
    %c0_i32_0 = arith.constant 0 : i32
    %c0_i32_1 = arith.constant 0 : i32
    %c0_i32_2 = arith.constant 0 : i32
    return %c0_i32, %c0_i32_0, %c0_i32_1 : i32, i32, i32
  }
  func.func @transform_2(%arg0: i32, %arg1: i32) -> (i32, i32, i32) {
    %c0_i32 = arith.constant 0 : i32
    %c0_i32_0 = arith.constant 0 : i32
    return %arg0, %arg1, %c0_i32 : i32, i32, i32
  }
}

</mosaic_0001>

<llo_original>
// kernel: tpu_custom_call.1
$region0: #{tpu_custom_call.1}
  #allocation0 [shape = 'u32[]', space=smem, size = 0x4, offset = 0x4, fixed_abs, tag = 'smem constant byte address 0x4 - core index']
  #allocation1 [shape = 'u32[72,128]{1,0:T(1,128)}', space=vmem, size = 0x9000, scoped, tag = 'internal scratch']
  %s0 = inlined_call_operand.hbm [shape: f32[2,8,128], index: 0, kind: input, shape index: {}]
  %s1 = inlined_call_operand.hbm [shape: f32[1,2,128], index: 1, kind: input, shape index: {}]
  %s2 = inlined_call_operand.hbm [shape: f32[2,8,128], index: 2, kind: output, shape index: {}]
  %s3 = sld [smem:[#allocation0]]
  $region26: #{tpu_custom_call.1} parent=0
    _
  %s5 = ssub.s32 1, %s3
  %s6 = scalar_select 0, %s5, %s3
  $region1: #{tpu_custom_call.1} parent=0
    #allocation2 [shape = 'u8[8192]{0}', space=vmem, size = 0x2000, scoped, tag = 'input window, operand 0, single buffered']
    #allocation3 [shape = 's32[1]{0}', space=sflag, size = 0x4, scoped, tag = 'scoped memory for tpu_custom_call.1']
    #allocation4 [shape = 's32[1]{0}', space=sflag, size = 0x4, scoped, tag = 'scoped memory for tpu_custom_call.1']
    #allocation5 [shape = 'u8[1024]{0}', space=vmem, size = 0x400, scoped, tag = 'input window, operand 1, single buffered']
    #allocation6 [shape = 's32[1]{0}', space=sflag, size = 0x4, scoped, tag = 'scoped memory for tpu_custom_call.1']
    #allocation7 [shape = 'u8[8192]{0}', space=vmem, size = 0x2000, scoped, tag = 'output window, operand 0, single buffered']
    %7 = vsyncpa [#allocation3], 0
    %8 = vsyncpa [#allocation6], 0
    %9 = vsyncpa [#allocation4], 0
    // Predicated region
    $region2: #{tpu_custom_call.1} parent=1 // pred_check
      _
    $region3: #{tpu_custom_call.1} parent=1 // pred_check_branch
      %11 = sbr.rel (0) target = $region5
    $region4: #{tpu_custom_call.1} parent=1 // pred_region
      %13 = vsyncadd [#allocation3], 0
      %s14 = sshll.u32 %s0, 4
      %s15 = int_to_ptr.hbm [resolvable:$true] %s14
      %s16 = sshll.u32 [#allocation2], 4
      %s17 = int_to_ptr.vmem [resolvable:$true] %s16
      %22 = dma.hbm_to_vmem [thread:$0]  %s15, 256, %s17, [#allocation3], 128, 128, 8
    $region5: #{tpu_custom_call.1} parent=1 // pred_fallthru
      _
    // Predicated region
    $region6: #{tpu_custom_call.1} parent=1 // pred_check
      _
    $region7: #{tpu_custom_call.1} parent=1 // pred_check_branch
      %24 = sbr.rel (0) target = $region9
    $region8: #{tpu_custom_call.1} parent=1 // pred_region
      %26 = vsyncadd [#allocation6], 0
      %s28 = sshll.u32 %s1, 4
      %s29 = int_to_ptr.hbm [resolvable:$true] %s28
      %s30 = sshll.u32 [#allocation5], 4
      %s31 = int_to_ptr.vmem [resolvable:$true] %s30
      %33 = dma.hbm_to_vmem [thread:$0]  %s29, 32, %s31, [#allocation6]
    $region9: #{tpu_custom_call.1} parent=1 // pred_fallthru
      _
    // Predicated region
    $region10: #{tpu_custom_call.1} parent=1 // pred_check
      _
    $region11: #{tpu_custom_call.1} parent=1 // pred_check_branch
      %35 = sbr.rel (0) target = $region13
    $region12: #{tpu_custom_call.1} parent=1 // pred_region
      %37 = dma.done [#allocation3], 256
    $region13: #{tpu_custom_call.1} parent=1 // pred_fallthru
      _
    // Predicated region
    $region14: #{tpu_custom_call.1} parent=1 // pred_check
      _
    $region15: #{tpu_custom_call.1} parent=1 // pred_check_branch
      %39 = sbr.rel (0) target = $region17
    $region16: #{tpu_custom_call.1} parent=1 // pred_region
      %41 = dma.done [#allocation6], 32
    $region17: #{tpu_custom_call.1} parent=1 // pred_fallthru
      _
    %s42 = smul.u32 0, 8
    %v43 = vlaneseq
    %v44 = vshrl.u32 %v43, 7
    %v45 = vstv %s42
    %v46 = vadd.s32 %v45, %v44
    %v47 = vcvt.s32.f32 %v46
    %v48 = vld [vmem:[#allocation5] sm:$0x1]
    %v49 = vld [vmem:[#allocation5 + $0x1] sm:$0x1]
    %v50 = vperm.slane %v48, 0
    %v51 = vmul.f32 %v47, %v50
    %v52 = vperm.slane %v49, 0
    %v53 = vadd.f32 %v51, %v52
    %v54 = vand.u32 2147483647, %v53
    %vm55 = vcmp.le.f32.partialorder %v54, 0.7853982
    %vm56 = vcmp.lt.s32.totalorder %v53, 0
    %v57 = vand.u32 %v53, 2139095040
    %v58 = vshrl.u32 %v57, 23
    %v59 = vsub.s32 %v58, 127
    %v60 = vand.u32 2147483647, %v53
    %v61 = vand.u32 %v60, 8388607
    %v62 = vor.u32 %v61, 8388608
    %v63 = vsub.s32 0, %v62
    %v64 = vadd.s32 %v59, 1
    %vm65 = vcmp.gt.s32.totalorder %v64, 0
    %v66 = vsel %vm65, %v64, 0
    %v67 = vshrl.u32 %v66, 5
    %v68 = vand.u32 %v66, 31
    %v69 = vsub.s32 32, %v68
    %v70 = vshrl.u32 683565275, %v69
    %v71 = vshll.u32 683565275, %v68
    %v72 = vshrl.u32 2475754826, %v69
    %v73 = vor.u32 %v71, %v72
    %v74 = vshll.u32 2475754826, %v68
    %v75 = vshrl.u32 2131351028, %v69
    %v76 = vor.u32 %v74, %v75
    %v77 = vshll.u32 2131351028, %v68
    %v78 = vshrl.u32 2102212464, %v69
    %v79 = vor.u32 %v77, %v78
    %v80 = vshll.u32 2102212464, %v68
    %v81 = vshrl.u32 920167782, %v69
    %v82 = vor.u32 %v80, %v81
    %v83 = vshll.u32 920167782, %v68
    %v84 = vshrl.u32 1326507024, %v69
    %v85 = vor.u32 %v83, %v84
    %vm86 = vcmp.lt.s32.totalorder %v67, 1
    %vm87 = vcmp.lt.s32.totalorder %v67, 2
    %vm88 = vcmp.lt.s32.totalorder %v67, 3
    %vm89 = vcmp.lt.s32.totalorder %v67, 4
    %v90 = vsel %vm86, %v70, %v73
    %v91 = vsel %vm89, %v79, 2102212464
    %v92 = vsel %vm88, %v76, %v91
    %v93 = vsel %vm87, %v90, %v92
    %v94 = vsel %vm86, %v73, %v76
    %v95 = vsel %vm89, %v82, 920167782
    %v96 = vsel %vm88, %v79, %v95
    %v97 = vsel %vm87, %v94, %v96
    %v98 = vsel %vm86, %v76, %v79
    %v99 = vsel %vm89, %v85, 1326507024
    %v100 = vsel %vm88, %v82, %v99
    %v101 = vsel %vm87, %v98, %v100
    %v102 = vshll.u32 %v62, 8
    %v103 = vand.u32 %v102, 65535
    %v104 = vshrl.u32 %v102, 16
    %v105 = vand.u32 %v101, 65535
    %v106 = vshrl.u32 %v101, 16
    %v107 = vmul.u32 %v103, %v105
    %v108 = vmul.u32 %v103, %v106
    %v109 = vmul.u32 %v104, %v105
    %v110 = vmul.u32 %v104, %v106
    %v111 = vshll.u32 %v108, 16
    %v112 = vshrl.u32 %v108, 16
    %v113 = vshll.u32 %v109, 16
    %v114 = vshrl.u32 %v109, 16
    %vm115 = vc.u32 %v107, %v111
    %v116 = vsel %vm115, 1, 0
    %v117 = vadd.s32 %v107, %v111
    %v118 = vadd.s32 %v110, %v116
    %vm119 = vc.u32 %v117, %v113
    %v120 = vsel %vm119, 1, 0
    %v121 = vadd.s32 %v117, %v113
    %v122 = vadd.s32 %v118, %v120
    %v123 = vadd.s32 %v122, %v112
    %v124 = vadd.s32 %v123, %v114
    %v125 = vand.u32 %v102, 65535
    %v126 = vshrl.u32 %v102, 16
    %v127 = vand.u32 %v97, 65535
    %v128 = vshrl.u32 %v97, 16
    %v129 = vmul.u32 %v125, %v127
    %v130 = vmul.u32 %v125, %v128
    %v131 = vmul.u32 %v126, %v127
    %v132 = vmul.u32 %v126, %v128
    %v133 = vshll.u32 %v130, 16
    %v134 = vshrl.u32 %v130, 16
    %v135 = vshll.u32 %v131, 16
    %v136 = vshrl.u32 %v131, 16
    %vm137 = vc.u32 %v129, %v133
    %v138 = vsel %vm137, 1, 0
    %v139 = vadd.s32 %v129, %v133
    %v140 = vadd.s32 %v132, %v138
    %vm141 = vc.u32 %v139, %v135
    %v142 = vsel %vm141, 1, 0
    %v143 = vadd.s32 %v139, %v135
    %v144 = vadd.s32 %v140, %v142
    %v145 = vadd.s32 %v144, %v134
    %v146 = vadd.s32 %v145, %v136
    %v147 = vmul.u32 %v102, %v93
    %v148 = vadd.s32 %v124, %v143
    %vm149 = vc.u32 %v124, %v143
    %v150 = vadd.s32 %v146, 1
    %v151 = vsel %vm149, %v150, %v146
    %v152 = vadd.s32 %v147, %v151
    %v153 = vadd.s32 %v152, 536870912
    %v154 = vshrl.u32 %v153, 30
    %v155 = vshll.u32 %v154, 30
    %v156 = vsub.s32 %v152, %v155
    %vm157 = vcmp.lt.s32.totalorder %v156, 0
    %v158 = vsub.s32 0, %v156
    %v159 = vsel %vm157, %v158, %v156
    %v160 = vclz %v159
    %v161 = vsub.s32 %v160, 2
    %vm162 = vcmp.gt.s32.totalorder 0, %v161
    %v163 = vsel %vm162, 0, %v161
    %v164 = vsub.s32 32, %v163
    %v165 = vshll.u32 %v156, %v163
    %v166 = vshrl.u32 %v148, %v164
    %v167 = vor.u32 %v165, %v166
    %v168 = vsub.s32 4294967266, %v163
    %v169 = vadd.s32 %v168, 127
    %v170 = vshll.u32 %v169, 23
    %v171 = vor.u32 4788187, %v170
    %v172 = vand.u32 2147483647, %v171
    %v174 = vcvt.s32.f32 %v167
    %v175 = vmul.f32 %v174, %v172
    %v176 = vxor.u32 %v175, 2147483648
    %v177 = vsel %vm56, %v176, %v175
    %v178 = vsub.s32 4, %v154
    %v179 = vsel %vm56, %v178, %v154
    %v180 = vsel %vm55, %v53, %v177
    %v181 = vsel %vm55, 0, %v179
    %v182 = vmul.f32 %v180, %v180
    %v183 = vmul.f32 %v182, -0.001358992
    %v184 = vadd.f32 %v183, 0.041655596
    %v185 = vmul.f32 %v182, %v184
    %v186 = vadd.f32 %v185, -0.4999988
    %v187 = vmul.f32 %v182, %v186
    %v188 = vadd.f32 1.0, %v187
    %v189 = vmul.f32 %v180, %v180
    %v190 = vmul.f32 %v189, -0.00019511016
    %v191 = vadd.f32 %v190, 0.008332121
    %v192 = vmul.f32 %v189, %v191
    %v193 = vadd.f32 %v192, -0.16666654
    %v194 = vmul.f32 %v189, %v193
    %v195 = vadd.f32 %v194, 1.0
    %v196 = vmul.f32 %v195, %v180
    %vm197 = vweird.f32 %v53
    %v198 = vadd.s32 %v181, 3
    %v199 = vand.u32 %v198, 3
    %vm200 = vcmp.lt.s32.totalorder %v199, 2
    %vm201 = vcmp.eq.s32.totalorder %v199, 0
    %v202 = vxor.u32 %v196, 2147483648
    %v203 = vsel %vm201, %v188, %v202
    %vm204 = vcmp.eq.s32.totalorder %v199, 2
    %v205 = vxor.u32 %v188, 2147483648
    %v206 = vsel %vm204, %v205, %v196
    %v207 = vsel %vm200, %v203, %v206
    %v208 = vsel %vm197, nan, %v207
    %v209 = vld [vmem:[#allocation2] sm:$0xff]
    %v210 = vld [vmem:[#allocation2 + $0x8] sm:$0xff]
    %v211 = vadd.f32 %v209, %v208
    %v212 = vadd.f32 %v210, %v208
    %213 = vst [vmem:[#allocation7] sm:$0xff] %v211
    %214 = vst [vmem:[#allocation7 + $0x8] sm:$0xff] %v212
    // Predicated region
    $region18: #{tpu_custom_call.1} parent=1 // pred_check
      _
    $region19: #{tpu_custom_call.1} parent=1 // pred_check_branch
      %216 = sbr.rel (0) target = $region21
    $region20: #{tpu_custom_call.1} parent=1 // pred_region
      %218 = vsyncadd [#allocation4], 0
      %s219 = sshll.u32 [#allocation7], 4
      %s220 = int_to_ptr.vmem [resolvable:$true] %s219
      %s221 = sshll.u32 %s2, 4
      %s222 = int_to_ptr.hbm [resolvable:$true] %s221
      %227 = dma.vmem_to_hbm [thread:$0]  %s220, 256, %s222, [#allocation4], 128, 128, 8
    $region21: #{tpu_custom_call.1} parent=1 // pred_fallthru
      _
    // Predicated region
    $region22: #{tpu_custom_call.1} parent=1 // pred_check
      _
    $region23: #{tpu_custom_call.1} parent=1 // pred_check_branch
      %229 = sbr.rel (0) target = $region25
    $region24: #{tpu_custom_call.1} parent=1 // pred_region
      %231 = dma.done [#allocation4], 256
    $region25: #{tpu_custom_call.1} parent=1 // pred_fallthru
      _
    %232 = vsyncpa [#allocation3], 1
    %233 = vsyncpa [#allocation6], 1
    %234 = vsyncpa [#allocation4], 1

</llo_original>
